<compile_context>
chip_gen: v6e
topology: v6e:2x2x1
jax: 0.10.0
libtpu: 0.0.40
codegen_flags: <defaults>
</compile_context>

<pallas_src>
import math
import functools

import jax
import jax.numpy as jnp
from jax import lax
from jax.experimental import pallas as pl
from jax.experimental.pallas import tpu as pltpu


def _perm_kernel(iters_ref, temp_ref, m_ref, lt_ref, out_ref, work_ref, *,
                 n, matmul_dtype):
    """One permutation matrix: Sinkhorn-normalize P, emit (P @ L @ P^T)^T."""
    t = temp_ref[0]            # effective temperature (runtime SMEM scalar)
    iters = iters_ref[0]       # effective Sinkhorn iteration count (runtime)

    m = m_ref[...].astype(jnp.float32)    # (n, n) P-bar parameter
    lt = lt_ref[...].astype(jnp.float32)  # (n, n) L-bar parameter, PRE-TRANSPOSED

    # exp(temperature * (matrix - row_max)) -> Sinkhorn working copy (scratch)
    max_row = jnp.max(m, axis=1, keepdims=True)
    work_ref[...] = jnp.exp(t * (m - max_row))

    # U = L^T = (sigmoid(L-bar) * tril)^T.  The wrapper passes L-bar^T, so the
    # mask here is the UPPER triangle and the first matmul below is a plain
    # ((1,),(0,)) contraction (no transposed-RHS form, no materialized vxpose).
    row_ids = lax.broadcasted_iota(jnp.int32, (n, n), 0)
    col_ids = lax.broadcasted_iota(jnp.int32, (n, n), 1)
    upper = jnp.where(col_ids >= row_ids, jax.nn.sigmoid(lt), 0.0)

    def _inv(s):
        # EUP approx reciprocal (separate issue slot) + one Newton refinement
        # (2 VPU muls) -> ~f32-exact, so the output stays doubly stochastic and
        # the test tolerance can be tight (1e-4 instead of 5e-3).
        r = pl.reciprocal(s, approx=True)
        return r * (2.0 - s * r)

    # Sinkhorn iterations: row-normalize then column-normalize.  The trip
    # count is a runtime scalar: no recompile every time epoch//10 changes and
    # no code-size blowup at high epochs (the old version fully unrolled
    # factor*unroll iterations).  The chain is latency-bound (XLU reduce ->
    # EUP recip -> VPU mul), so dropping the full unroll costs nothing.
    @pl.loop(0, iters)
    def _(_):
        x = work_ref[...]
        x = x * _inv(jnp.sum(x, axis=1, keepdims=True))
        work_ref[...] = x * _inv(jnp.sum(x, axis=0, keepdims=True))

    p = work_ref[...].astype(matmul_dtype)
    u = upper.astype(matmul_dtype)
    # output_lower = (P @ L @ P^T)^T = P @ L^T @ P^T = (P @ U) @ P^T
    tmp = lax.dot_general(p, u, (((1,), (0,)), ((), ())),
                          preferred_element_type=jnp.float32)
    res = lax.dot_general(tmp.astype(matmul_dtype), p, (((1,), (1,)), ((), ())),
                          preferred_element_type=jnp.float32)
    out_ref[...] = res.astype(out_ref.dtype)


def permutation_matrix_forward(matrix, lower, epoch, temperature, unroll):
    """Pallas implementation of PermutationMatrix.forward(epoch).

    Accepts a single (n, n) parameter pair (like the PyTorch module) or a
    batch (B, n, n) of independent permutation matrices; the batch becomes a
    "parallel" grid axis (sharded across TensorCores on v7x).
    """
    matrix = jnp.asarray(matrix, jnp.float32)
    lower = jnp.asarray(lower, jnp.float32)
    squeeze = matrix.ndim == 2
    if squeeze:
        matrix = matrix[None]
        lower = lower[None]
    b, n, _ = matrix.shape

    # Both scalars are runtime values -> works with a traced `epoch` too and
    # never triggers a recompile when epoch//10 changes.
    factor = epoch // 10 + 1
    eff_temperature = jnp.reshape(jnp.asarray(factor * temperature, jnp.float32), (1,))
    eff_iters = jnp.reshape(jnp.asarray(factor * unroll, jnp.int32), (1,))

    # Pass L-bar^T from the wrapper (free for tiny arrays, XLA handles it) so
    # the first in-kernel matmul is a plain contraction.
    lower_t = jnp.swapaxes(lower, -1, -2)

    # bf16 operands cut MXU passes ~2-3x; only worth it (and only acceptable
    # accuracy-wise) once n is large.  Keep f32 at small n for exact results.
    matmul_dtype = jnp.bfloat16 if n >= 256 else jnp.float32

    # Rough live-VMEM estimate (double-buffered IO blocks + temporaries); only
    # set an explicit limit when it exceeds the conservative v5e scoped
    # default.  The single-block design caps out near n~1.6k on v7x (64 MiB
    # physical); grid the two matmuls before scaling n into the thousands.
    est_vmem_bytes = 12 * n * n * 4
    vmem_limit = None
    if est_vmem_bytes > (16 << 20):
        vmem_limit = min(est_vmem_bytes, 64 << 20)

    kernel = functools.partial(_perm_kernel, n=n, matmul_dtype=matmul_dtype)

    out = pl.pallas_call(
        kernel,
        out_shape=jax.ShapeDtypeStruct((b, n, n), jnp.float32),
        grid_spec=pltpu.PrefetchScalarGridSpec(
            num_scalar_prefetch=2,          # eff_iters, eff_temperature -> SMEM
            grid=(b,),
            in_specs=[
                pl.BlockSpec((pl.Squeezed(), n, n), lambda i, it, tp: (i, 0, 0)),
                pl.BlockSpec((pl.Squeezed(), n, n), lambda i, it, tp: (i, 0, 0)),
            ],
            out_specs=pl.BlockSpec((pl.Squeezed(), n, n),
                                   lambda i, it, tp: (i, 0, 0)),
            scratch_shapes=[pltpu.VMEM((n, n), jnp.float32)],  # Sinkhorn buffer
        ),
        compiler_params=pltpu.CompilerParams(
            dimension_semantics=("parallel",),
            vmem_limit_bytes=vmem_limit,
        ),
    )(eff_iters, eff_temperature, matrix, lower_t)

    return out[0] if squeeze else out


def _reference(matrix, lower, epoch, temperature, unroll):
    n = matrix.shape[0]
    factor = epoch // 10 + 1
    eff_t = factor * temperature
    eff_u = factor * unroll
    max_row = jnp.max(matrix, axis=1, keepdims=True)
    mat = jnp.exp(eff_t * (matrix - max_row))
    low = jax.nn.sigmoid(lower) * jnp.tril(jnp.ones((n, n), jnp.float32))
    for _ in range(eff_u):
        mat = mat / jnp.sum(mat, axis=1, keepdims=True)
        mat = mat / jnp.sum(mat, axis=0, keepdims=True)
    hp = lax.Precision.HIGHEST
    out = jnp.matmul(jnp.matmul(mat, low, precision=hp), mat.T, precision=hp)
    return out.T


if __name__ == "__main__":
    input_size = 16
    temperature = 2.0
    unroll = 5
    epoch = 3

    key = jax.random.PRNGKey(0)
    k_matrix, k_lower, k_bm, k_bl = jax.random.split(key, 4)

    # kaiming_uniform_(matrix, a=sqrt(input_size)): fan_in = input_size,
    # gain = sqrt(2 / (1 + a^2)), bound = gain * sqrt(3 / fan_in)
    a = math.sqrt(input_size)
    gain = math.sqrt(2.0 / (1.0 + a * a))
    bound = gain * math.sqrt(3.0 / input_size)
    matrix_param = jax.random.uniform(
        k_matrix, (input_size, input_size), jnp.float32, -bound, bound)
    lower_param = 0.1 * jax.random.normal(
        k_lower, (input_size, input_size), jnp.float32)

    # --- single matrix (matches PermutationMatrix.forward(epoch)) ---
    out = permutation_matrix_forward(
        matrix_param, lower_param, epoch, temperature, unroll)
    out = jax.block_until_ready(out)
    ref = _reference(matrix_param, lower_param, epoch, temperature, unroll)
    assert out.shape == (input_size, input_size)
    assert jnp.allclose(out, ref, atol=1e-4, rtol=1e-4), "single-matrix mismatch"

    # --- batched call: independent matrices on a "parallel" grid axis ---
    bm = jax.random.uniform(
        k_bm, (2, input_size, input_size), jnp.float32, -bound, bound)
    bl = 0.1 * jax.random.normal(k_bl, (2, input_size, input_size), jnp.float32)
    bout = jax.block_until_ready(
        permutation_matrix_forward(bm, bl, epoch, temperature, unroll))
    for i in range(2):
        bref = _reference(bm[i], bl[i], epoch, temperature, unroll)
        assert jnp.allclose(bout[i], bref, atol=1e-4, rtol=1e-4), f"batch {i} mismatch"

    # --- epoch change: same compiled kernel, different runtime scalars ---
    out2 = jax.block_until_ready(
        permutation_matrix_forward(matrix_param, lower_param, 25, temperature, unroll))
    ref2 = _reference(matrix_param, lower_param, 25, temperature, unroll)
    assert jnp.allclose(out2, ref2, atol=1e-4, rtol=1e-4), "epoch=25 mismatch"

    # TODO(synk): causal_order / ideal permutation (argmax + scatter) are only
    # used for verbose printing in the PyTorch module and are not part of the
    # returned value, so they are omitted.
    print("KERNEL_OK")
</pallas_src>

<mosaic_0001>
module attributes {stable_mosaic.version = 11 : i64} {
  func.func @_perm_kernel(%arg0: i32, %arg1: memref<1xi32, #tpu.memory_space<smem>>, %arg2: memref<1xf32, #tpu.memory_space<smem>>, %arg3: memref<1x16x16xf32, #tpu.memory_space<vmem>>, %arg4: memref<1x16x16xf32, #tpu.memory_space<vmem>>, %arg5: memref<1x16x16xf32, #tpu.memory_space<vmem>>, %arg6: memref<16x16xf32, #tpu.memory_space<vmem>>) attributes {dimension_semantics = [#tpu.dimension_semantics<parallel>], iteration_bounds = array<i64: 1>, scalar_prefetch = 2 : i64, scratch_operands = 1 : i64, tpu.core_type = #tpu.core_type<tc>, window_params = [{transform_indices = @transform_0, window_bounds = array<i64: 1, 16, 16>}, {transform_indices = @transform_1, window_bounds = array<i64: 1, 16, 16>}, {transform_indices = @transform_2, window_bounds = array<i64: 1, 16, 16>}]} {
    %c0 = arith.constant 0 : index
    %0 = memref.load %arg2[%c0] : memref<1xf32, #tpu.memory_space<smem>>
    %c0_0 = arith.constant 0 : index
    %1 = memref.load %arg1[%c0_0] : memref<1xi32, #tpu.memory_space<smem>>
    %c0_1 = arith.constant 0 : index
    %c0_2 = arith.constant 0 : index
    %c0_3 = arith.constant 0 : index
    %2 = vector.load %arg3[%c0_1, %c0_2, %c0_3] : memref<1x16x16xf32, #tpu.memory_space<vmem>>, vector<1x16x16xf32>
    %3 = vector.shape_cast %2 : vector<1x16x16xf32> to vector<16x16xf32>
    %c0_4 = arith.constant 0 : index
    %c0_5 = arith.constant 0 : index
    %c0_6 = arith.constant 0 : index
    %4 = vector.load %arg4[%c0_4, %c0_5, %c0_6] : memref<1x16x16xf32, #tpu.memory_space<vmem>>, vector<1x16x16xf32>
    %5 = vector.shape_cast %4 : vector<1x16x16xf32> to vector<16x16xf32>
    %cst = arith.constant dense<0xFF800000> : vector<16xf32>
    %6 = vector.multi_reduction <maximumf>, %3, %cst [1] : vector<16x16xf32> to vector<16xf32>
    %7 = vector.shape_cast %6 : vector<16xf32> to vector<16x1xf32>
    %8 = vector.broadcast %7 : vector<16x1xf32> to vector<16x16xf32>
    %9 = arith.subf %3, %8 : vector<16x16xf32>
    %10 = vector.broadcast %0 : f32 to vector<16x16xf32>
    %11 = arith.mulf %10, %9 : vector<16x16xf32>
    %12 = math.exp %11 : vector<16x16xf32>
    %c0_7 = arith.constant 0 : index
    %c0_8 = arith.constant 0 : index
    %13 = vector.load %arg6[%c0_7, %c0_8] : memref<16x16xf32, #tpu.memory_space<vmem>>, vector<16x16xf32>
    tpu.vector_store %arg6[%c0_7, %c0_8], %12 {strides = array<i32>} : memref<16x16xf32, #tpu.memory_space<vmem>>, vector<16x16xf32>,
    %14 = tpu.iota {dimensions = array<i32: 0>} : vector<16x16xi32>
    %15 = tpu.iota {dimensions = array<i32: 1>} : vector<16x16xi32>
    %16 = arith.cmpi sge, %15, %14 : vector<16x16xi32>
    %17 = arith.negf %5 : vector<16x16xf32>
    %18 = math.exp %17 : vector<16x16xf32>
    %cst_9 = arith.constant 1.000000e+00 : f32
    %19 = vector.broadcast %cst_9 : f32 to vector<16x16xf32>
    %20 = arith.addf %19, %18 : vector<16x16xf32>
    %21 = arith.divf %19, %20 : vector<16x16xf32>
    %cst_10 = arith.constant 0.000000e+00 : f32
    %22 = vector.broadcast %cst_10 : f32 to vector<16x16xf32>
    %23 = arith.select %16, %21, %22 : vector<16x16xi1>, vector<16x16xf32>
    %c0_i32 = arith.constant 0 : i32
    %24 = arith.subi %1, %c0_i32 : i32
    %c1_i32 = arith.constant 1 : i32
    %c1_i32_11 = arith.constant 1 : i32
    %25 = arith.subi %c1_i32, %c1_i32_11 : i32
    %26 = arith.addi %24, %25 : i32
    %c1_i32_12 = arith.constant 1 : i32
    %27 = arith.divsi %26, %c1_i32_12 : i32
    %c1_i32_13 = arith.constant 1 : i32
    %c0_i32_14 = arith.constant 0 : i32
    %c0_i32_15 = arith.constant 0 : i32
    %28 = arith.subi %27, %c0_i32_15 : i32
    %29 = arith.addi %c0_i32_15, %28 : i32
    %c1_i32_16 = arith.constant 1 : i32
    scf.for %arg7 = %c0_i32_15 to %29 step %c1_i32_16  : i32 {
      %36 = arith.muli %arg7, %c1_i32_13 : i32
      %37 = arith.addi %c0_i32_14, %36 : i32
      %c0_24 = arith.constant 0 : index
      %c0_25 = arith.constant 0 : index
      %38 = vector.load %arg6[%c0_24, %c0_25] : memref<16x16xf32, #tpu.memory_space<vmem>>, vector<16x16xf32>
      %cst_26 = arith.constant dense<0.000000e+00> : vector<16xf32>
      %39 = vector.multi_reduction <add>, %38, %cst_26 [1] : vector<16x16xf32> to vector<16xf32>
      %40 = vector.shape_cast %39 : vector<16xf32> to vector<16x1xf32>
      %41 = tpu.reciprocal %40 {approx = true} : vector<16x1xf32> -> vector<16x1xf32>
      %42 = arith.mulf %40, %41 : vector<16x1xf32>
      %cst_27 = arith.constant 2.000000e+00 : f32
      %43 = vector.broadcast %cst_27 : f32 to vector<16x1xf32>
      %44 = arith.subf %43, %42 : vector<16x1xf32>
      %45 = arith.mulf %41, %44 : vector<16x1xf32>
      %46 = vector.broadcast %45 : vector<16x1xf32> to vector<16x16xf32>
      %47 = arith.mulf %38, %46 : vector<16x16xf32>
      %cst_28 = arith.constant dense<0.000000e+00> : vector<16xf32>
      %48 = vector.multi_reduction <add>, %47, %cst_28 [0] : vector<16x16xf32> to vector<16xf32>
      %49 = vector.shape_cast %48 : vector<16xf32> to vector<1x16xf32>
      %50 = tpu.reciprocal %49 {approx = true} : vector<1x16xf32> -> vector<1x16xf32>
      %51 = arith.mulf %49, %50 : vector<1x16xf32>
      %cst_29 = arith.constant 2.000000e+00 : f32
      %52 = vector.broadcast %cst_29 : f32 to vector<1x16xf32>
      %53 = arith.subf %52, %51 : vector<1x16xf32>
      %54 = arith.mulf %50, %53 : vector<1x16xf32>
      %55 = vector.broadcast %54 : vector<1x16xf32> to vector<16x16xf32>
      %56 = arith.mulf %47, %55 : vector<16x16xf32>
      %c0_30 = arith.constant 0 : index
      %c0_31 = arith.constant 0 : index
      %57 = vector.load %arg6[%c0_30, %c0_31] : memref<16x16xf32, #tpu.memory_space<vmem>>, vector<16x16xf32>
      tpu.vector_store %arg6[%c0_30, %c0_31], %56 {strides = array<i32>} : memref<16x16xf32, #tpu.memory_space<vmem>>, vector<16x16xf32>,
    }
    %c0_17 = arith.constant 0 : index
    %c0_18 = arith.constant 0 : index
    %30 = vector.load %arg6[%c0_17, %c0_18] : memref<16x16xf32, #tpu.memory_space<vmem>>, vector<16x16xf32>
    %cst_19 = arith.constant dense<0.000000e+00> : vector<16x16xf32>
    %31 = tpu.matmul %30, %23, %cst_19 {dimension_numbers = #tpu.dot_dimension_numbers<[1], [0], [0], [1], [0, 0, 1, 1], [], []>} : vector<16x16xf32>, vector<16x16xf32>, vector<16x16xf32> -> vector<16x16xf32>
    %cst_20 = arith.constant dense<0.000000e+00> : vector<16x16xf32>
    %32 = tpu.matmul %31, %30, %cst_20 {dimension_numbers = #tpu.dot_dimension_numbers<[1], [1], [0], [0], [0, 0, 1, 0], [], []>} : vector<16x16xf32>, vector<16x16xf32>, vector<16x16xf32> -> vector<16x16xf32>
    %c0_21 = arith.constant 0 : index
    %c0_22 = arith.constant 0 : index
    %c0_23 = arith.constant 0 : index
    %33 = vector.load %arg5[%c0_21, %c0_22, %c0_23] : memref<1x16x16xf32, #tpu.memory_space<vmem>>, vector<1x16x16xf32>
    %34 = vector.shape_cast %33 : vector<1x16x16xf32> to vector<16x16xf32>
    %35 = vector.shape_cast %32 : vector<16x16xf32> to vector<1x16x16xf32>
    tpu.vector_store %arg5[%c0_21, %c0_22, %c0_23], %35 {strides = array<i32>} : memref<1x16x16xf32, #tpu.memory_space<vmem>>, vector<1x16x16xf32>,
    return
  }
  func.func @transform_0(%arg0: i32, %arg1: memref<1xi32, #tpu.memory_space<smem>>, %arg2: memref<1xf32, #tpu.memory_space<smem>>) -> (i32, i32, i32) {
    %c0_i32 = arith.constant 0 : i32
    %c0_i32_0 = arith.constant 0 : i32
    %c0_i32_1 = arith.constant 0 : i32
    return %arg0, %c0_i32, %c0_i32_0 : i32, i32, i32
  }
  func.func @transform_1(%arg0: i32, %arg1: memref<1xi32, #tpu.memory_space<smem>>, %arg2: memref<1xf32, #tpu.memory_space<smem>>) -> (i32, i32, i32) {
    %c0_i32 = arith.constant 0 : i32
    %c0_i32_0 = arith.constant 0 : i32
    %c0_i32_1 = arith.constant 0 : i32
    return %arg0, %c0_i32, %c0_i32_0 : i32, i32, i32
  }
  func.func @transform_2(%arg0: i32, %arg1: memref<1xi32, #tpu.memory_space<smem>>, %arg2: memref<1xf32, #tpu.memory_space<smem>>) -> (i32, i32, i32) {
    %c0_i32 = arith.constant 0 : i32
    %c0_i32_0 = arith.constant 0 : i32
    %c0_i32_1 = arith.constant 0 : i32
    return %arg0, %c0_i32, %c0_i32_0 : i32, i32, i32
  }
}

</mosaic_0001>

<llo_original>
// kernel: tpu_custom_call.1
$region0: #{tpu_custom_call.1}
  #allocation0 [shape = 'u32[]', space=smem, size = 0x4, offset = 0x4, fixed_abs, tag = 'smem constant byte address 0x4 - core index']
  #allocation1 [shape = 'u32[144,128]{1,0:T(1,128)}', space=vmem, size = 0x12000, scoped, tag = 'internal scratch']
  #allocation2 [shape = 'f32[16,16]{1,0:T(8,128)}', space=vmem, size = 0x2000, scoped, tag = 'scratch operand']
  #allocation3 [shape = 's32[1]{0}', space=sflag, size = 0x4, scoped, tag = 'scoped memory for tpu_custom_call.1']
  #allocation4 [shape = 's32[1]{0:T(128)S(6)}', space=smem, size = 0x200, scoped, tag = 'prefetched SMEM operand 0']
  #allocation5 [shape = 'f32[1]{0:T(128)S(6)}', space=smem, size = 0x200, scoped, tag = 'prefetched SMEM operand 1']
  %s0 = inlined_call_operand.<no memory space> [shape: s32[1], index: 0, kind: input, shape index: {}]
  %s1 = inlined_call_operand.<no memory space> [shape: f32[1], index: 1, kind: input, shape index: {}]
  %s2 = inlined_call_operand.hbm [shape: f32[1,16,16], index: 2, kind: input, shape index: {}]
  %s3 = inlined_call_operand.hbm [shape: f32[1,16,16], index: 3, kind: input, shape index: {}]
  %s4 = inlined_call_operand.hbm [shape: f32[1,16,16], index: 4, kind: output, shape index: {}]
  %s5 = sld [smem:[#allocation0]]
  $region33: #{tpu_custom_call.1} parent=0
    _
  %s7 = ssub.s32 1, %s5
  %s8 = scalar_select 0, %s7, %s5
  %9 = sst [smem:[#allocation4]] %s0
  %10 = sst [smem:[#allocation5]] %s1
  $region1: #{tpu_custom_call.1} parent=0
    #allocation6 [shape = 'u8[8192]{0}', space=vmem, size = 0x2000, scoped, tag = 'input window, operand 2, single buffered']
    #allocation7 [shape = 's32[1]{0}', space=sflag, size = 0x4, scoped, tag = 'scoped memory for tpu_custom_call.1']
    #allocation8 [shape = 's32[1]{0}', space=sflag, size = 0x4, scoped, tag = 'scoped memory for tpu_custom_call.1']
    #allocation9 [shape = 'u8[8192]{0}', space=vmem, size = 0x2000, scoped, tag = 'input window, operand 3, single buffered']
    #allocation10 [shape = 's32[1]{0}', space=sflag, size = 0x4, scoped, tag = 'scoped memory for tpu_custom_call.1']
    #allocation11 [shape = 'u8[8192]{0}', space=vmem, size = 0x2000, scoped, tag = 'output window, operand 0, single buffered']
    %11 = vsyncpa [#allocation7], 0
    %12 = vsyncpa [#allocation10], 0
    %13 = vsyncpa [#allocation8], 0
    // Predicated region
    $region2: #{tpu_custom_call.1} parent=1 // pred_check
      _
    $region3: #{tpu_custom_call.1} parent=1 // pred_check_branch
      %15 = sbr.rel (0) target = $region5
    $region4: #{tpu_custom_call.1} parent=1 // pred_region
      %s17 = ssub.s32 256, 256
      %18 = vsyncadd [#allocation7], %s17
      %s19 = sshll.u32 [#allocation6], 4
      %s20 = int_to_ptr.vmem [resolvable:$true] %s19
      %25 = dma.hbm_to_vmem [thread:$0]  %s2, 256, %s20, [#allocation7], 128, 128, 8
    $region5: #{tpu_custom_call.1} parent=1 // pred_fallthru
      _
    // Predicated region
    $region6: #{tpu_custom_call.1} parent=1 // pred_check
      _
    $region7: #{tpu_custom_call.1} parent=1 // pred_check_branch
      %27 = sbr.rel (0) target = $region9
    $region8: #{tpu_custom_call.1} parent=1 // pred_region
      %s29 = ssub.s32 256, 256
      %30 = vsyncadd [#allocation10], %s29
      %s31 = sshll.u32 [#allocation9], 4
      %s32 = int_to_ptr.vmem [resolvable:$true] %s31
      %37 = dma.hbm_to_vmem [thread:$0]  %s3, 256, %s32, [#allocation10], 128, 128, 8
    $region9: #{tpu_custom_call.1} parent=1 // pred_fallthru
      _
    // Predicated region
    $region10: #{tpu_custom_call.1} parent=1 // pred_check
      _
    $region11: #{tpu_custom_call.1} parent=1 // pred_check_branch
      %39 = sbr.rel (0) target = $region13
    $region12: #{tpu_custom_call.1} parent=1 // pred_region
      %40 = dma.done [#allocation7], 256
    $region13: #{tpu_custom_call.1} parent=1 // pred_fallthru
      _
    // Predicated region
    $region14: #{tpu_custom_call.1} parent=1 // pred_check
      _
    $region15: #{tpu_custom_call.1} parent=1 // pred_check_branch
      %42 = sbr.rel (0) target = $region17
    $region16: #{tpu_custom_call.1} parent=1 // pred_region
      %43 = dma.done [#allocation10], 256
    $region17: #{tpu_custom_call.1} parent=1 // pred_fallthru
      _
    %s44 = sld [smem:[#allocation5]]
    %s45 = sld [smem:[#allocation4]]
    %v46 = vld [vmem:[#allocation6] sm:$0xff]
    %v47 = vld [vmem:[#allocation6 + $0x8] sm:$0xff]
    %v48 = vld [vmem:[#allocation9] sm:$0xff]
    %v49 = vld [vmem:[#allocation9 + $0x8] sm:$0xff]
    %vm50 = vcmask 130048
    %v51 = vsel %vm50, %v46, -inf
    %52 = vmax.xlane.f32.xlu0 %v51
    %v53 = vpop.xlane.xlu0 %52
    %v54 = vsel %vm50, %v47, -inf
    %55 = vmax.xlane.f32.xlu0 %v54
    %v56 = vpop.xlane.xlu0 %55
    %v57 = vsub.f32 %v46, %v53
    %v58 = vsub.f32 %v47, %v56
    %v59 = vstv %s44
    %v60 = vmul.f32 %v59, %v57
    %v61 = vmul.f32 %v59, %v58
    %v62 = vmul.f32 %v60, 1.442695
    %v63 = vpow.pop %v62
    %v64 = vmul.f32 %v61, 1.442695
    %v65 = vpow.pop %v64
    %66 = vst.msk [vmem:[#allocation2] sm:$0xff] %vm50, %v63
    %67 = vst.msk [vmem:[#allocation2 + $0x8] sm:$0xff] %vm50, %v65
    %v68 = vlaneseq
    %v69 = vshrl.u32 %v68, 7
    %v70 = vadd.s32 %v69, 8
    %v71 = vlaneseq
    %v72 = vand.u32 %v71, 127
    %vm73 = vcmp.ge.s32.totalorder %v72, %v69
    %vm74 = vcmp.ge.s32.totalorder %v72, %v70
    %v75 = vxor.u32 %v48, 2147483648
    %v76 = vxor.u32 %v49, 2147483648
    %v77 = vmul.f32 %v75, 1.442695
    %v78 = vpow.pop %v77
    %v79 = vmul.f32 %v76, 1.442695
    %v80 = vpow.pop %v79
    %v81 = vadd.f32 %v78, 1.0
    %v82 = vadd.f32 %v80, 1.0
    %v83 = vrcp.pop %v81
    %v84 = vmul.f32 1.0, %v83
    %v85 = vrcp.pop %v82
    %v86 = vmul.f32 1.0, %v85
    %v87 = vsel %vm73, %v84, 0.0
    %v88 = vsel %vm74, %v86, 0.0
    // While loop
    $region18: #{tpu_custom_call.1} parent=1 // loop_pre_header
      _
    $region19: #{tpu_custom_call.1} parent=1 // loop_header
      %s90 = sphi 0, %s92
      %p91 = scmp.ge.s32.totalorder %s90, %s45
    $region20: #{tpu_custom_call.1} parent=1 // loop_header_branch
      %94 = sbr.rel (%p91) target = $region24
    $region21: #{tpu_custom_call.1} parent=1 // loop_body
      %v95 = vld [vmem:[#allocation2] sm:$0xff]
      %v96 = vld [vmem:[#allocation2 + $0x8] sm:$0xff]
      %v97 = vsel %vm50, %v95, 0.0
      %98 = vadd.xlane.f32.xlu0 %v97
      %v99 = vpop.xlane.xlu0 %98
      %v100 = vsel %vm50, %v96, 0.0
      %101 = vadd.xlane.f32.xlu0 %v100
      %v102 = vpop.xlane.xlu0 %101
      %v103 = vrcp.pop %v99
      %v104 = vrcp.pop %v102
      %v105 = vmul.f32 %v99, %v103
      %v106 = vmul.f32 %v102, %v104
      %v107 = vsub.f32 2.0, %v105
      %v108 = vsub.f32 2.0, %v106
      %v109 = vmul.f32 %v103, %v107
      %v110 = vmul.f32 %v104, %v108
      %v111 = vmul.f32 %v95, %v109
      %v112 = vmul.f32 %v96, %v110
      %v113 = vsel %vm50, %v111, 0.0
      %v114 = vsel %vm50, %v112, 0.0
      %v115 = vadd.f32 %v113, %v114
      %v116 = vrot.slane %v115, 4
      %v117 = vadd.f32 %v115, %v116
      %v118 = vrot.slane %v117, 2
      %v119 = vadd.f32 %v117, %v118
      %v120 = vrot.slane %v119, 1
      %v121 = vadd.f32 %v119, %v120
      %v122 = vrcp.pop %v121
      %v123 = vmul.f32 %v121, %v122
      %v124 = vsub.f32 2.0, %v123
      %v125 = vmul.f32 %v122, %v124
      %v126 = vmul.f32 %v111, %v125
      %v127 = vmul.f32 %v112, %v125
      %128 = vst.msk [vmem:[#allocation2] sm:$0xff] %vm50, %v126
      %129 = vst.msk [vmem:[#allocation2 + $0x8] sm:$0xff] %vm50, %v127
    $region22: #{tpu_custom_call.1} parent=1 // loop_footer
      %s92 = sadd.s32 %s90, 1
    $region23: #{tpu_custom_call.1} parent=1 // loop_footer_branch
      %89 = sbr.rel target = $region19
    $region24: #{tpu_custom_call.1} parent=1 // loop_exit
      _
    %v130 = vld [vmem:[#allocation2] sm:$0xff]
    %v131 = vld [vmem:[#allocation2 + $0x8] sm:$0xff]
    %v133 = vsel %vm50, %v130, 0
    %v136 = vsel %vm50, %v131, 0
    %138 = vmatprep.subr.mxu0 0.0
    %139 = vmatpush1.msra.mxu0 0.0
    %140 = vmatprep.subr.mxu0 0.0
    %141 = vmatpush1.msra.mxu0 0.0
    %142 = vmatprep.subr.mxu0 0.0
    %143 = vmatpush1.msra.mxu0 0.0
    %144 = vmatprep.subr.mxu0 0.0
    %145 = vmatpush1.msra.mxu0 0.0
    %146 = vmatprep.subr.mxu0 0.0
    %147 = vmatpush1.msra.mxu0 0.0
    %148 = vmatprep.subr.mxu0 0.0
    %149 = vmatpush1.msra.mxu0 0.0
    %150 = vmatprep.subr.mxu0 0.0
    %151 = vmatpush1.msra.mxu0 0.0
    %152 = vmatprep.subr.mxu0 0.0
    %153 = vmatpush1.msra.mxu0 0.0
    %154 = vmatprep.subr.mxu0 0.0
    %155 = vmatpush1.msra.mxu0 0.0
    %156 = vmatprep.subr.mxu0 0.0
    %157 = vmatpush1.msra.mxu0 0.0
    %158 = vmatprep.subr.mxu0 0.0
    %159 = vmatpush1.msra.mxu0 0.0
    %160 = vmatprep.subr.mxu0 0.0
    %161 = vmatpush1.msra.mxu0 0.0
    %162 = vmatprep.subr.mxu0 0.0
    %163 = vmatpush1.msra.mxu0 0.0
    %164 = vmatprep.subr.mxu0 0.0
    %165 = vmatpush1.msra.mxu0 0.0
    %166 = vmatprep.subr.mxu0 0.0
    %167 = vmatpush1.msra.mxu0 %v88
    %168 = vmatprep.subr.mxu0 0.0
    %169 = vmatpush1.msra.mxu0 %v87
    %170 = vmatprep.subr.mxu0 0.0
    %171 = vmatpush2.msra.mxu0 0.0
    %172 = vmatprep.subr.mxu0 0.0
    %173 = vmatpush2.msra.mxu0 0.0
    %174 = vmatprep.subr.mxu0 0.0
    %175 = vmatpush2.msra.mxu0 0.0
    %176 = vmatprep.subr.mxu0 0.0
    %177 = vmatpush2.msra.mxu0 0.0
    %178 = vmatprep.subr.mxu0 0.0
    %179 = vmatpush2.msra.mxu0 0.0
    %180 = vmatprep.subr.mxu0 0.0
    %181 = vmatpush2.msra.mxu0 0.0
    %182 = vmatprep.subr.mxu0 0.0
    %183 = vmatpush2.msra.mxu0 0.0
    %184 = vmatprep.subr.mxu0 0.0
    %185 = vmatpush2.msra.mxu0 0.0
    %186 = vmatprep.subr.mxu0 0.0
    %187 = vmatpush2.msra.mxu0 0.0
    %188 = vmatprep.subr.mxu0 0.0
    %189 = vmatpush2.msra.mxu0 0.0
    %190 = vmatprep.subr.mxu0 0.0
    %191 = vmatpush2.msra.mxu0 0.0
    %192 = vmatprep.subr.mxu0 0.0
    %193 = vmatpush2.msra.mxu0 0.0
    %194 = vmatprep.subr.mxu0 0.0
    %195 = vmatpush2.msra.mxu0 0.0
    %196 = vmatprep.subr.mxu0 0.0
    %197 = vmatpush2.msra.mxu0 0.0
    %198 = vmatprep.subr.mxu0 0.0
    %199 = vmatpush2.msra.mxu0 0.0
    %200 = vmatprep.subr.mxu0 0.0
    %201 = vmatpush2.msra.mxu0 0.0
    %202 = vmatprep.mubr.f32.mxu0 0.0
    %203 = vmatmul.mubr.f32.gmra.mxu0 %v133
    %v204 = vpop.f32.mrf.mxu0
    %v205 = vadd.f32 0.0, %v204
    %v206 = vpop.f32.mrf.mxu0
    %207 = vmatprep.mubr.f32.mxu0 0.0
    %208 = vmatmul.mubr.f32.gmra.mxu0 %v136
    %v209 = vpop.f32.mrf.mxu0
    %v210 = vadd.f32 0.0, %v209
    %v211 = vpop.f32.mrf.mxu0
    %212 = vdwg.mxu0
    %v214 = vsel %vm50, %v205, 0
    %v217 = vsel %vm50, %v210, 0
    %219 = vmatprep.subr.mxu0 0.0
    %220 = vmatpush1.xpose.msra.mxu0 0.0
    %221 = vmatprep.subr.mxu0 0.0
    %222 = vmatpush1.xpose.msra.mxu0 0.0
    %223 = vmatprep.subr.mxu0 0.0
    %224 = vmatpush1.xpose.msra.mxu0 0.0
    %225 = vmatprep.subr.mxu0 0.0
    %226 = vmatpush1.xpose.msra.mxu0 0.0
    %227 = vmatprep.subr.mxu0 0.0
    %228 = vmatpush1.xpose.msra.mxu0 0.0
    %229 = vmatprep.subr.mxu0 0.0
    %230 = vmatpush1.xpose.msra.mxu0 0.0
    %231 = vmatprep.subr.mxu0 0.0
    %232 = vmatpush1.xpose.msra.mxu0 0.0
    %233 = vmatprep.subr.mxu0 0.0
    %234 = vmatpush1.xpose.msra.mxu0 0.0
    %235 = vmatprep.subr.mxu0 0.0
    %236 = vmatpush1.xpose.msra.mxu0 0.0
    %237 = vmatprep.subr.mxu0 0.0
    %238 = vmatpush1.xpose.msra.mxu0 0.0
    %239 = vmatprep.subr.mxu0 0.0
    %240 = vmatpush1.xpose.msra.mxu0 0.0
    %241 = vmatprep.subr.mxu0 0.0
    %242 = vmatpush1.xpose.msra.mxu0 0.0
    %243 = vmatprep.subr.mxu0 0.0
    %244 = vmatpush1.xpose.msra.mxu0 0.0
    %245 = vmatprep.subr.mxu0 0.0
    %246 = vmatpush1.xpose.msra.mxu0 0.0
    %247 = vmatprep.subr.mxu0 0.0
    %248 = vmatpush1.xpose.msra.mxu0 %v136
    %249 = vmatprep.subr.mxu0 0.0
    %250 = vmatpush1.xpose.msra.mxu0 %v133
    %251 = vmatprep.subr.mxu0 0.0
    %252 = vmatpush2.xpose.msra.mxu0 0.0
    %253 = vmatprep.subr.mxu0 0.0
    %254 = vmatpush2.xpose.msra.mxu0 0.0
    %255 = vmatprep.subr.mxu0 0.0
    %256 = vmatpush2.xpose.msra.mxu0 0.0
    %257 = vmatprep.subr.mxu0 0.0
    %258 = vmatpush2.xpose.msra.mxu0 0.0
    %259 = vmatprep.subr.mxu0 0.0
    %260 = vmatpush2.xpose.msra.mxu0 0.0
    %261 = vmatprep.subr.mxu0 0.0
    %262 = vmatpush2.xpose.msra.mxu0 0.0
    %263 = vmatprep.subr.mxu0 0.0
    %264 = vmatpush2.xpose.msra.mxu0 0.0
    %265 = vmatprep.subr.mxu0 0.0
    %266 = vmatpush2.xpose.msra.mxu0 0.0
    %267 = vmatprep.subr.mxu0 0.0
    %268 = vmatpush2.xpose.msra.mxu0 0.0
    %269 = vmatprep.subr.mxu0 0.0
    %270 = vmatpush2.xpose.msra.mxu0 0.0
    %271 = vmatprep.subr.mxu0 0.0
    %272 = vmatpush2.xpose.msra.mxu0 0.0
    %273 = vmatprep.subr.mxu0 0.0
    %274 = vmatpush2.xpose.msra.mxu0 0.0
    %275 = vmatprep.subr.mxu0 0.0
    %276 = vmatpush2.xpose.msra.mxu0 0.0
    %277 = vmatprep.subr.mxu0 0.0
    %278 = vmatpush2.xpose.msra.mxu0 0.0
    %279 = vmatprep.subr.mxu0 0.0
    %280 = vmatpush2.xpose.msra.mxu0 0.0
    %281 = vmatprep.subr.mxu0 0.0
    %282 = vmatpush2.xpose.msra.mxu0 0.0
    %283 = vmatprep.mubr.f32.mxu0 0.0
    %284 = vmatmul.mubr.f32.gmra.mxu0 %v214
    %v285 = vpop.f32.mrf.mxu0
    %v286 = vadd.f32 0.0, %v285
    %v287 = vpop.f32.mrf.mxu0
    %288 = vmatprep.mubr.f32.mxu0 0.0
    %289 = vmatmul.mubr.f32.gmra.mxu0 %v217
    %v290 = vpop.f32.mrf.mxu0
    %v291 = vadd.f32 0.0, %v290
    %v292 = vpop.f32.mrf.mxu0
    %293 = vdwg.mxu0
    %294 = vst.msk [vmem:[#allocation11] sm:$0xff] %vm50, %v286
    %295 = vst.msk [vmem:[#allocation11 + $0x8] sm:$0xff] %vm50, %v291
    // Predicated region
    $region25: #{tpu_custom_call.1} parent=1 // pred_check
      _
    $region26: #{tpu_custom_call.1} parent=1 // pred_check_branch
      %297 = sbr.rel (0) target = $region28
    $region27: #{tpu_custom_call.1} parent=1 // pred_region
      %s299 = ssub.s32 256, 256
      %300 = vsyncadd [#allocation8], %s299
      %s301 = sshll.u32 [#allocation11], 4
      %s302 = int_to_ptr.vmem [resolvable:$true] %s301
      %307 = dma.vmem_to_hbm [thread:$0]  %s302, 256, %s4, [#allocation8], 128, 128, 8
    $region28: #{tpu_custom_call.1} parent=1 // pred_fallthru
      _
    // Predicated region
    $region29: #{tpu_custom_call.1} parent=1 // pred_check
      _
    $region30: #{tpu_custom_call.1} parent=1 // pred_check_branch
      %309 = sbr.rel (0) target = $region32
    $region31: #{tpu_custom_call.1} parent=1 // pred_region
      %310 = dma.done [#allocation8], 256
    $region32: #{tpu_custom_call.1} parent=1 // pred_fallthru
      _
    %311 = vsyncpa [#allocation7], 1
    %312 = vsyncpa [#allocation10], 1
    %313 = vsyncpa [#allocation8], 1

</llo_original>
